<compile_context>
chip_gen: v5e
topology: v5e:2x2
jax: 0.10.0
libtpu: 0.0.40
codegen_flags: <defaults>
</compile_context>

<pallas_src>
import inspect
from functools import partial

import jax
import jax.numpy as jnp
from jax import lax
from jax.experimental import pallas as pl
from jax.experimental.pallas import tpu as pltpu


def _round_up(n, m):
    return (n + m - 1) // m * m


def _gelu_erf(x):
    # PyTorch F.gelu default = exact erf gelu
    return 0.5 * x * (1.0 + lax.erf(x * 0.7071067811865476))


def _gelu_tanh(x):
    # tanh approximation: runs on the EUP slot instead of a long VALU erf polynomial
    c = 0.7978845608028654  # sqrt(2/pi)
    return 0.5 * x * (1.0 + jnp.tanh(c * (x + 0.044715 * (x * x * x))))


def _layernorm(x, gamma, beta, eps=1e-5):
    # Single-pass LN: var = E[x^2] - mean^2 (two independent lane reductions)
    inv_d = 1.0 / x.shape[-1]
    s1 = jnp.sum(x, axis=-1, keepdims=True)
    s2 = jnp.sum(x * x, axis=-1, keepdims=True)
    mean = s1 * inv_d
    var = s2 * inv_d - mean * mean
    inv = lax.rsqrt(var + eps)
    return (x - mean) * inv * gamma + beta


def resblock_kernel(x_ref, w1_ref, w2_ref, p_ref, o_ref, *, approx_gelu=False):
    gelu = _gelu_tanh if approx_gelu else _gelu_erf

    # Packed params loaded ONCE, then sliced as a value (single 8xD vld).
    # Rows: 0=b1, 1=g1, 2=be1, 3=b2, 4=0.5*g2, 5=0.5*be2 (rows 6,7 padding).
    p = p_ref[...]
    b1, g1, be1 = p[0:1, :], p[1:2, :], p[2:3, :]
    b2, g2h, be2h = p[3:4, :], p[4:5, :], p[5:6, :]

    # fc1 -> gelu -> ln1   (MXU in weight dtype, f32 accumulation + f32 VPU math)
    h = jnp.dot(x_ref[...].astype(w1_ref.dtype), w1_ref[...],
                preferred_element_type=jnp.float32) + b1
    h = _layernorm(gelu(h), g1, be1)

    # fc2 -> gelu -> ln2 (0.5 residual scale already folded into g2h/be2h)
    h = jnp.dot(h.astype(w2_ref.dtype), w2_ref[...],
                preferred_element_type=jnp.float32) + b2
    h = _layernorm(gelu(h), g2h, be2h)

    # Residual: re-read x from the resident VMEM tile (keeps x vreg live range short).
    o_ref[...] = (x_ref[...].astype(jnp.float32) + h).astype(o_ref.dtype)


def _supports_pipeline_mode():
    if not hasattr(pl, "Buffered"):
        return False
    try:
        return "pipeline_mode" in inspect.signature(pl.BlockSpec).parameters
    except (TypeError, ValueError):
        return False


_HAS_BUFFERED = _supports_pipeline_mode()


def _const_spec(shape):
    # Constant operands (weights, packed LN/bias params): single-buffer when the
    # jax build supports pipeline_mode; otherwise default buffering (still only
    # DMA'd once since the block index never changes).
    if _HAS_BUFFERED:
        return pl.BlockSpec(shape, lambda i: (0, 0), pipeline_mode=pl.Buffered(1))
    return pl.BlockSpec(shape, lambda i: (0, 0))


def _vmem_capacity_bytes():
    cap = 128 << 20  # v5e/v6e physical VMEM
    try:  # environment probe only (not guarding kernel compilation)
        info = pltpu.get_tpu_info()
        cap = int(getattr(info, "vmem_capacity_bytes", cap) or cap)
    except Exception:
        pass
    return cap


def resblock_pallas(x, params, *, row_tile=1024, matmul_dtype=jnp.bfloat16,
                    approx_gelu=False):
    """x: (..., D). params: w1/w2 stored as (in, out); b*, g*, be* as (D,)."""
    D = x.shape[-1]
    orig_shape = x.shape
    x2 = x.reshape(-1, D)
    R = x2.shape[0]

    # --- row tiling -------------------------------------------------------
    # Sublane multiple depends on activation dtype (bf16 packs 16 rows / tile).
    sub = 16 if x2.dtype == jnp.bfloat16 else 8
    row_tile = _round_up(max(row_tile, sub), sub)
    Rsub = _round_up(R, sub)
    n_steps = pl.cdiv(Rsub, row_tile)
    # With enough rows, force >=2 grid steps so the 'parallel' axis can shard
    # across both TensorCores on megacore parts (an extra step is ~free on 1-TC chips).
    if n_steps < 2 and Rsub >= 1024:
        n_steps = 2
    tile = _round_up(pl.cdiv(Rsub, n_steps), sub)   # rebalanced -> minimal padding
    Rp = tile * n_steps
    if Rp != R:
        x2 = jnp.pad(x2, ((0, Rp - R), (0, 0)))

    # --- operands ----------------------------------------------------------
    w1 = params["w1"].astype(matmul_dtype)
    w2 = params["w2"].astype(matmul_dtype)
    # Pack all six (D,) vectors into ONE (8, D) operand; fold the 0.5 residual
    # scale into LN2's affine params.
    pvec = jnp.stack([
        params["b1"], params["g1"], params["be1"],
        params["b2"], 0.5 * params["g2"], 0.5 * params["be2"],
    ]).astype(jnp.float32)
    pvec = jnp.pad(pvec, ((0, 2), (0, 0)))          # (8, D): one full sublane tile

    # --- VMEM budget (generation-aware) -------------------------------------
    w_item = jnp.dtype(matmul_dtype).itemsize
    x_item = jnp.dtype(x.dtype).itemsize
    needed = (2 * 2 * D * D * w_item        # both weights (budget 2 buffers each)
              + 2 * 2 * tile * D * x_item   # double-buffered x / out tiles
              + 2 * 8 * D * 4               # packed LN/bias params
              + 4 * tile * D * 4)           # f32 intermediates headroom
    cap = _vmem_capacity_bytes()
    vmem_limit = int(min(int(0.85 * cap), max(32 << 20, needed + (4 << 20))))
    # TODO(synk): for D >= ~2048 with f32 weights, add a K-reduction grid axis
    # ('arbitrary') with an f32 VMEM accumulator to stay inside v7x's 64 MiB VMEM.

    out = pl.pallas_call(
        partial(resblock_kernel, approx_gelu=approx_gelu),
        out_shape=jax.ShapeDtypeStruct((Rp, D), x.dtype),
        grid_spec=pltpu.PrefetchScalarGridSpec(
            num_scalar_prefetch=0,
            grid=(n_steps,),
            in_specs=[
                pl.BlockSpec((tile, D), lambda i: (i, 0)),   # x tile (double-buffered)
                _const_spec((D, D)),                         # W1, stored (in, out)
                _const_spec((D, D)),                         # W2, stored (in, out)
                _const_spec((8, D)),                         # packed b1,g1,be1,b2,.5g2,.5be2
            ],
            out_specs=pl.BlockSpec((tile, D), lambda i: (i, 0)),
        ),
        compiler_params=pltpu.CompilerParams(
            dimension_semantics=("parallel",),
            vmem_limit_bytes=vmem_limit),
    )(x2, w1, w2, pvec)

    return out[:R].reshape(orig_shape)


def init_params(key, dim):
    # nn.Linear-style init. Weights are stored PRE-TRANSPOSED as (in, out) so the
    # kernel computes x @ W directly (transpose once at load time for torch weights).
    k1, k2, k3, k4 = jax.random.split(key, 4)
    bound = 1.0 / jnp.sqrt(dim)
    return {
        "w1": jax.random.uniform(k1, (dim, dim), jnp.float32, -bound, bound),
        "b1": jax.random.uniform(k2, (dim,), jnp.float32, -bound, bound),
        "w2": jax.random.uniform(k3, (dim, dim), jnp.float32, -bound, bound),
        "b2": jax.random.uniform(k4, (dim,), jnp.float32, -bound, bound),
        "g1": jnp.ones((dim,), jnp.float32),    # LayerNorm weight
        "be1": jnp.zeros((dim,), jnp.float32),  # LayerNorm bias
        "g2": jnp.ones((dim,), jnp.float32),
        "be2": jnp.zeros((dim,), jnp.float32),
    }


def resblock_ref(x, params, matmul_dtype=jnp.bfloat16, approx_gelu=False):
    # Pure-JAX reference (weights stored (in, out)); mirrors the kernel's matmul
    # operand dtype (bf16 on the MXU, f32 accumulation) and uses classic two-pass LN.
    gelu = _gelu_tanh if approx_gelu else _gelu_erf

    def ln(h, g, b):
        m = jnp.mean(h, axis=-1, keepdims=True)
        v = jnp.mean(jnp.square(h - m), axis=-1, keepdims=True)
        return (h - m) * lax.rsqrt(v + 1e-5) * g + b

    md = matmul_dtype
    w1 = params["w1"].astype(md)
    w2 = params["w2"].astype(md)
    h = jnp.dot(x.astype(md), w1, preferred_element_type=jnp.float32) + params["b1"]
    h = ln(gelu(h), params["g1"], params["be1"])
    h = jnp.dot(h.astype(md), w2, preferred_element_type=jnp.float32) + params["b2"]
    h = ln(gelu(h), params["g2"], params["be2"])
    return x + 0.5 * h


if __name__ == "__main__":
    key = jax.random.PRNGKey(0)
    kx, kp, kx2, kx3 = jax.random.split(key, 4)

    dim = 128
    params = init_params(kp, dim)

    # Tolerances account for bf16 MXU operands (kernel and reference use the same
    # casting; residual differences come from erf/LN lowering + bf16 requantization).
    ATOL = RTOL = 2e-3

    # (batch, seq, dim) activations, as used inside the GRU trajectory model.
    x = jax.random.normal(kx, (2, 8, dim), jnp.float32)
    y = jax.block_until_ready(resblock_pallas(x, params))
    assert y.shape == x.shape
    assert jnp.allclose(y, resblock_ref(x, params), atol=ATOL, rtol=RTOL), \
        "mismatch vs reference"

    # Ragged row count (batch*seq not a multiple of 8) -> exercises pad/slice path.
    x2 = jax.random.normal(kx2, (5, 13, dim), jnp.float32)
    y2 = jax.block_until_ready(resblock_pallas(x2, params))
    assert jnp.allclose(y2, resblock_ref(x2, params), atol=ATOL, rtol=RTOL), \
        "mismatch vs reference (ragged)"

    # Larger row count -> multi-step grid (pipelined rows, 2+ 'parallel' steps).
    x3 = jax.random.normal(kx3, (16, 80, dim), jnp.float32)
    y3 = jax.block_until_ready(resblock_pallas(x3, params))
    assert jnp.allclose(y3, resblock_ref(x3, params), atol=ATOL, rtol=RTOL), \
        "mismatch vs reference (multi-tile)"

    print("KERNEL_OK")
</pallas_src>

<mosaic_0001>
module attributes {stable_mosaic.version = 11 : i64} {
  func.func @resblock_kernel(%arg0: i32, %arg1: memref<16x128xf32, #tpu.memory_space<vmem>>, %arg2: memref<128x128xbf16, #tpu.memory_space<vmem>>, %arg3: memref<128x128xbf16, #tpu.memory_space<vmem>>, %arg4: memref<8x128xf32, #tpu.memory_space<vmem>>, %arg5: memref<16x128xf32, #tpu.memory_space<vmem>>) attributes {dimension_semantics = [#tpu.dimension_semantics<parallel>], iteration_bounds = array<i64: 1>, scalar_prefetch = 0 : i64, scratch_operands = 0 : i64, tpu.core_type = #tpu.core_type<tc>, window_params = [{transform_indices = @transform_0, window_bounds = array<i64: 16, 128>}, {pipeline_mode = #tpu.pipeline_mode<synchronous>, transform_indices = @transform_1, window_bounds = array<i64: 128, 128>}, {pipeline_mode = #tpu.pipeline_mode<synchronous>, transform_indices = @transform_2, window_bounds = array<i64: 128, 128>}, {pipeline_mode = #tpu.pipeline_mode<synchronous>, transform_indices = @transform_3, window_bounds = array<i64: 8, 128>}, {transform_indices = @transform_4, window_bounds = array<i64: 16, 128>}]} {
    %c0 = arith.constant 0 : index
    %c0_0 = arith.constant 0 : index
    %0 = vector.load %arg4[%c0, %c0_0] : memref<8x128xf32, #tpu.memory_space<vmem>>, vector<8x128xf32>
    %1 = vector.extract_strided_slice %0 {offsets = [0, 0], sizes = [1, 128], strides = [1, 1]} : vector<8x128xf32> to vector<1x128xf32>
    %2 = vector.extract_strided_slice %0 {offsets = [1, 0], sizes = [1, 128], strides = [1, 1]} : vector<8x128xf32> to vector<1x128xf32>
    %3 = vector.extract_strided_slice %0 {offsets = [2, 0], sizes = [1, 128], strides = [1, 1]} : vector<8x128xf32> to vector<1x128xf32>
    %4 = vector.extract_strided_slice %0 {offsets = [3, 0], sizes = [1, 128], strides = [1, 1]} : vector<8x128xf32> to vector<1x128xf32>
    %5 = vector.extract_strided_slice %0 {offsets = [4, 0], sizes = [1, 128], strides = [1, 1]} : vector<8x128xf32> to vector<1x128xf32>
    %6 = vector.extract_strided_slice %0 {offsets = [5, 0], sizes = [1, 128], strides = [1, 1]} : vector<8x128xf32> to vector<1x128xf32>
    %c0_1 = arith.constant 0 : index
    %c0_2 = arith.constant 0 : index
    %7 = vector.load %arg1[%c0_1, %c0_2] : memref<16x128xf32, #tpu.memory_space<vmem>>, vector<16x128xf32>
    %8 = arith.truncf %7 : vector<16x128xf32> to vector<16x128xbf16>
    %c0_3 = arith.constant 0 : index
    %c0_4 = arith.constant 0 : index
    %9 = vector.load %arg2[%c0_3, %c0_4] : memref<128x128xbf16, #tpu.memory_space<vmem>>, vector<128x128xbf16>
    %cst = arith.constant dense<0.000000e+00> : vector<16x128xf32>
    %10 = tpu.matmul %8, %9, %cst {dimension_numbers = #tpu.dot_dimension_numbers<[1], [0], [0], [1], [0, 0, 1, 1], [], []>} : vector<16x128xbf16>, vector<128x128xbf16>, vector<16x128xf32> -> vector<16x128xf32>
    %11 = vector.broadcast %1 : vector<1x128xf32> to vector<16x128xf32>
    %12 = arith.addf %10, %11 : vector<16x128xf32>
    %cst_5 = arith.constant 5.000000e-01 : f32
    %13 = vector.broadcast %cst_5 : f32 to vector<16x128xf32>
    %14 = arith.mulf %13, %12 : vector<16x128xf32>
    %cst_6 = arith.constant 0.707106769 : f32
    %15 = vector.broadcast %cst_6 : f32 to vector<16x128xf32>
    %16 = arith.mulf %12, %15 : vector<16x128xf32>
    %17 = math.erf %16 : vector<16x128xf32>
    %cst_7 = arith.constant 1.000000e+00 : f32
    %18 = vector.broadcast %cst_7 : f32 to vector<16x128xf32>
    %19 = arith.addf %18, %17 : vector<16x128xf32>
    %20 = arith.mulf %14, %19 : vector<16x128xf32>
    %cst_8 = arith.constant dense<0.000000e+00> : vector<16xf32>
    %21 = vector.multi_reduction <add>, %20, %cst_8 [1] : vector<16x128xf32> to vector<16xf32>
    %22 = vector.shape_cast %21 : vector<16xf32> to vector<16x1xf32>
    %23 = arith.mulf %20, %20 : vector<16x128xf32>
    %cst_9 = arith.constant dense<0.000000e+00> : vector<16xf32>
    %24 = vector.multi_reduction <add>, %23, %cst_9 [1] : vector<16x128xf32> to vector<16xf32>
    %25 = vector.shape_cast %24 : vector<16xf32> to vector<16x1xf32>
    %cst_10 = arith.constant 7.812500e-03 : f32
    %26 = vector.broadcast %cst_10 : f32 to vector<16x1xf32>
    %27 = arith.mulf %22, %26 : vector<16x1xf32>
    %cst_11 = arith.constant 7.812500e-03 : f32
    %28 = vector.broadcast %cst_11 : f32 to vector<16x1xf32>
    %29 = arith.mulf %25, %28 : vector<16x1xf32>
    %30 = arith.mulf %27, %27 : vector<16x1xf32>
    %31 = arith.subf %29, %30 : vector<16x1xf32>
    %cst_12 = arith.constant 9.99999974E-6 : f32
    %32 = vector.broadcast %cst_12 : f32 to vector<16x1xf32>
    %33 = arith.addf %31, %32 : vector<16x1xf32>
    %34 = math.rsqrt %33 : vector<16x1xf32>
    %35 = vector.broadcast %27 : vector<16x1xf32> to vector<16x128xf32>
    %36 = arith.subf %20, %35 : vector<16x128xf32>
    %37 = vector.broadcast %34 : vector<16x1xf32> to vector<16x128xf32>
    %38 = arith.mulf %36, %37 : vector<16x128xf32>
    %39 = vector.broadcast %2 : vector<1x128xf32> to vector<16x128xf32>
    %40 = arith.mulf %38, %39 : vector<16x128xf32>
    %41 = vector.broadcast %3 : vector<1x128xf32> to vector<16x128xf32>
    %42 = arith.addf %40, %41 : vector<16x128xf32>
    %43 = arith.truncf %42 : vector<16x128xf32> to vector<16x128xbf16>
    %c0_13 = arith.constant 0 : index
    %c0_14 = arith.constant 0 : index
    %44 = vector.load %arg3[%c0_13, %c0_14] : memref<128x128xbf16, #tpu.memory_space<vmem>>, vector<128x128xbf16>
    %cst_15 = arith.constant dense<0.000000e+00> : vector<16x128xf32>
    %45 = tpu.matmul %43, %44, %cst_15 {dimension_numbers = #tpu.dot_dimension_numbers<[1], [0], [0], [1], [0, 0, 1, 1], [], []>} : vector<16x128xbf16>, vector<128x128xbf16>, vector<16x128xf32> -> vector<16x128xf32>
    %46 = vector.broadcast %4 : vector<1x128xf32> to vector<16x128xf32>
    %47 = arith.addf %45, %46 : vector<16x128xf32>
    %cst_16 = arith.constant 5.000000e-01 : f32
    %48 = vector.broadcast %cst_16 : f32 to vector<16x128xf32>
    %49 = arith.mulf %48, %47 : vector<16x128xf32>
    %cst_17 = arith.constant 0.707106769 : f32
    %50 = vector.broadcast %cst_17 : f32 to vector<16x128xf32>
    %51 = arith.mulf %47, %50 : vector<16x128xf32>
    %52 = math.erf %51 : vector<16x128xf32>
    %cst_18 = arith.constant 1.000000e+00 : f32
    %53 = vector.broadcast %cst_18 : f32 to vector<16x128xf32>
    %54 = arith.addf %53, %52 : vector<16x128xf32>
    %55 = arith.mulf %49, %54 : vector<16x128xf32>
    %cst_19 = arith.constant dense<0.000000e+00> : vector<16xf32>
    %56 = vector.multi_reduction <add>, %55, %cst_19 [1] : vector<16x128xf32> to vector<16xf32>
    %57 = vector.shape_cast %56 : vector<16xf32> to vector<16x1xf32>
    %58 = arith.mulf %55, %55 : vector<16x128xf32>
    %cst_20 = arith.constant dense<0.000000e+00> : vector<16xf32>
    %59 = vector.multi_reduction <add>, %58, %cst_20 [1] : vector<16x128xf32> to vector<16xf32>
    %60 = vector.shape_cast %59 : vector<16xf32> to vector<16x1xf32>
    %cst_21 = arith.constant 7.812500e-03 : f32
    %61 = vector.broadcast %cst_21 : f32 to vector<16x1xf32>
    %62 = arith.mulf %57, %61 : vector<16x1xf32>
    %cst_22 = arith.constant 7.812500e-03 : f32
    %63 = vector.broadcast %cst_22 : f32 to vector<16x1xf32>
    %64 = arith.mulf %60, %63 : vector<16x1xf32>
    %65 = arith.mulf %62, %62 : vector<16x1xf32>
    %66 = arith.subf %64, %65 : vector<16x1xf32>
    %cst_23 = arith.constant 9.99999974E-6 : f32
    %67 = vector.broadcast %cst_23 : f32 to vector<16x1xf32>
    %68 = arith.addf %66, %67 : vector<16x1xf32>
    %69 = math.rsqrt %68 : vector<16x1xf32>
    %70 = vector.broadcast %62 : vector<16x1xf32> to vector<16x128xf32>
    %71 = arith.subf %55, %70 : vector<16x128xf32>
    %72 = vector.broadcast %69 : vector<16x1xf32> to vector<16x128xf32>
    %73 = arith.mulf %71, %72 : vector<16x128xf32>
    %74 = vector.broadcast %5 : vector<1x128xf32> to vector<16x128xf32>
    %75 = arith.mulf %73, %74 : vector<16x128xf32>
    %76 = vector.broadcast %6 : vector<1x128xf32> to vector<16x128xf32>
    %77 = arith.addf %75, %76 : vector<16x128xf32>
    %c0_24 = arith.constant 0 : index
    %c0_25 = arith.constant 0 : index
    %78 = vector.load %arg1[%c0_24, %c0_25] : memref<16x128xf32, #tpu.memory_space<vmem>>, vector<16x128xf32>
    %79 = arith.addf %78, %77 : vector<16x128xf32>
    %c0_26 = arith.constant 0 : index
    %c0_27 = arith.constant 0 : index
    %80 = vector.load %arg5[%c0_26, %c0_27] : memref<16x128xf32, #tpu.memory_space<vmem>>, vector<16x128xf32>
    tpu.vector_store %arg5[%c0_26, %c0_27], %79 {strides = array<i32>} : memref<16x128xf32, #tpu.memory_space<vmem>>, vector<16x128xf32>,
    return
  }
  func.func @transform_0(%arg0: i32) -> (i32, i32) {
    %c0_i32 = arith.constant 0 : i32
    %c0_i32_0 = arith.constant 0 : i32
    return %arg0, %c0_i32 : i32, i32
  }
  func.func @transform_1(%arg0: i32) -> (i32, i32) {
    %c0_i32 = arith.constant 0 : i32
    %c0_i32_0 = arith.constant 0 : i32
    %c0_i32_1 = arith.constant 0 : i32
    return %c0_i32, %c0_i32_0 : i32, i32
  }
  func.func @transform_2(%arg0: i32) -> (i32, i32) {
    %c0_i32 = arith.constant 0 : i32
    %c0_i32_0 = arith.constant 0 : i32
    %c0_i32_1 = arith.constant 0 : i32
    return %c0_i32, %c0_i32_0 : i32, i32
  }
  func.func @transform_3(%arg0: i32) -> (i32, i32) {
    %c0_i32 = arith.constant 0 : i32
    %c0_i32_0 = arith.constant 0 : i32
    %c0_i32_1 = arith.constant 0 : i32
    return %c0_i32, %c0_i32_0 : i32, i32
  }
  func.func @transform_4(%arg0: i32) -> (i32, i32) {
    %c0_i32 = arith.constant 0 : i32
    %c0_i32_0 = arith.constant 0 : i32
    return %arg0, %c0_i32 : i32, i32
  }
}

</mosaic_0001>

<llo_original>
// kernel: tpu_custom_call.1
$region0: #{tpu_custom_call.1}
  #allocation0 [shape = 'u32[]', space=smem, size = 0x4, offset = 0x4, fixed_abs, tag = 'smem constant byte address 0x4 - core index']
  #allocation1 [shape = 'u32[72,128]{1,0:T(1,128)}', space=vmem, size = 0x9000, scoped, tag = 'internal scratch']
  %s0 = inlined_call_operand.hbm [shape: f32[16,128], index: 0, kind: input, shape index: {}]
  %s1 = inlined_call_operand.hbm [shape: bf16[128,128], index: 1, kind: input, shape index: {}]
  %s2 = inlined_call_operand.hbm [shape: bf16[128,128], index: 2, kind: input, shape index: {}]
  %s3 = inlined_call_operand.hbm [shape: f32[8,128], index: 3, kind: input, shape index: {}]
  %s4 = inlined_call_operand.hbm [shape: f32[16,128], index: 4, kind: output, shape index: {}]
  %s5 = sld [smem:[#allocation0]]
  $region42: #{tpu_custom_call.1} parent=0
    _
  %s7 = ssub.s32 1, %s5
  %s8 = scalar_select 0, %s7, %s5
  $region1: #{tpu_custom_call.1} parent=0
    #allocation2 [shape = 'u8[8192]{0}', space=vmem, size = 0x2000, scoped, tag = 'input window, operand 0, single buffered']
    #allocation3 [shape = 's32[1]{0}', space=sflag, size = 0x4, scoped, tag = 'scoped memory for tpu_custom_call.1']
    #allocation4 [shape = 's32[1]{0}', space=sflag, size = 0x4, scoped, tag = 'scoped memory for tpu_custom_call.1']
    #allocation5 [shape = 'u8[32768]{0}', space=vmem, size = 0x8000, scoped, tag = 'input window, operand 1, single buffered']
    #allocation6 [shape = 's32[1]{0}', space=sflag, size = 0x4, scoped, tag = 'scoped memory for tpu_custom_call.1']
    #allocation7 [shape = 'u8[32768]{0}', space=vmem, size = 0x8000, scoped, tag = 'input window, operand 2, single buffered']
    #allocation8 [shape = 'u8[4096]{0}', space=vmem, size = 0x1000, scoped, tag = 'input window, operand 3, single buffered']
    #allocation9 [shape = 's32[1]{0}', space=sflag, size = 0x4, scoped, tag = 'scoped memory for tpu_custom_call.1']
    #allocation10 [shape = 'u8[8192]{0}', space=vmem, size = 0x2000, scoped, tag = 'output window, operand 0, single buffered']
    %9 = vsyncpa [#allocation3], 0
    %10 = vsyncpa [#allocation6], 0
    %11 = vsyncpa [#allocation9], 0
    %12 = vsyncpa [#allocation4], 0
    // Predicated region
    $region2: #{tpu_custom_call.1} parent=1 // pred_check
      _
    $region3: #{tpu_custom_call.1} parent=1 // pred_check_branch
      %14 = sbr.rel (0) target = $region5
    $region4: #{tpu_custom_call.1} parent=1 // pred_region
      %16 = vsyncadd [#allocation3], 0
      %s17 = sshll.u32 %s0, 4
      %s18 = int_to_ptr.hbm [resolvable:$true] %s17
      %s19 = sshll.u32 [#allocation2], 4
      %s20 = int_to_ptr.vmem [resolvable:$true] %s19
      %25 = dma.hbm_to_vmem [thread:$0]  %s18, 256, %s20, [#allocation3], 128, 128, 8
    $region5: #{tpu_custom_call.1} parent=1 // pred_fallthru
      _
    // Predicated region
    $region6: #{tpu_custom_call.1} parent=1 // pred_check
      _
    $region7: #{tpu_custom_call.1} parent=1 // pred_check_branch
      %27 = sbr.rel (0) target = $region9
    $region8: #{tpu_custom_call.1} parent=1 // pred_region
      %29 = vsyncadd [#allocation6], 0
      %s30 = sshll.u32 %s1, 4
      %s31 = int_to_ptr.hbm [resolvable:$true] %s30
      %s32 = sshll.u32 [#allocation5], 4
      %s33 = int_to_ptr.vmem [resolvable:$true] %s32
      %38 = dma.hbm_to_vmem [thread:$0]  %s31, 1024, %s33, [#allocation6], 64, 64, 4
    $region9: #{tpu_custom_call.1} parent=1 // pred_fallthru
      _
    // Predicated region
    $region10: #{tpu_custom_call.1} parent=1 // pred_check
      _
    $region11: #{tpu_custom_call.1} parent=1 // pred_check_branch
      %40 = sbr.rel (0) target = $region13
    $region12: #{tpu_custom_call.1} parent=1 // pred_region
      %42 = vsyncadd [#allocation6], 0
      %s43 = sshll.u32 %s2, 4
      %s44 = int_to_ptr.hbm [resolvable:$true] %s43
      %s45 = sshll.u32 [#allocation7], 4
      %s46 = int_to_ptr.vmem [resolvable:$true] %s45
      %51 = dma.hbm_to_vmem [thread:$0]  %s44, 1024, %s46, [#allocation6], 64, 64, 4
    $region13: #{tpu_custom_call.1} parent=1 // pred_fallthru
      _
    // Predicated region
    $region14: #{tpu_custom_call.1} parent=1 // pred_check
      _
    $region15: #{tpu_custom_call.1} parent=1 // pred_check_branch
      %53 = sbr.rel (0) target = $region17
    $region16: #{tpu_custom_call.1} parent=1 // pred_region
      %55 = vsyncadd [#allocation9], 0
      %s57 = sshll.u32 %s3, 4
      %s58 = int_to_ptr.hbm [resolvable:$true] %s57
      %s59 = sshll.u32 [#allocation8], 4
      %s60 = int_to_ptr.vmem [resolvable:$true] %s59
      %62 = dma.hbm_to_vmem [thread:$0]  %s58, 128, %s60, [#allocation9]
    $region17: #{tpu_custom_call.1} parent=1 // pred_fallthru
      _
    // Predicated region
    $region18: #{tpu_custom_call.1} parent=1 // pred_check
      _
    $region19: #{tpu_custom_call.1} parent=1 // pred_check_branch
      %64 = sbr.rel (0) target = $region21
    $region20: #{tpu_custom_call.1} parent=1 // pred_region
      %66 = dma.done [#allocation3], 256
    $region21: #{tpu_custom_call.1} parent=1 // pred_fallthru
      _
    // Predicated region
    $region22: #{tpu_custom_call.1} parent=1 // pred_check
      _
    $region23: #{tpu_custom_call.1} parent=1 // pred_check_branch
      %68 = sbr.rel (0) target = $region25
    $region24: #{tpu_custom_call.1} parent=1 // pred_region
      %70 = dma.done [#allocation6], 1024
    $region25: #{tpu_custom_call.1} parent=1 // pred_fallthru
      _
    // Predicated region
    $region26: #{tpu_custom_call.1} parent=1 // pred_check
      _
    $region27: #{tpu_custom_call.1} parent=1 // pred_check_branch
      %72 = sbr.rel (0) target = $region29
    $region28: #{tpu_custom_call.1} parent=1 // pred_region
      %74 = dma.done [#allocation6], 1024
    $region29: #{tpu_custom_call.1} parent=1 // pred_fallthru
      _
    // Predicated region
    $region30: #{tpu_custom_call.1} parent=1 // pred_check
      _
    $region31: #{tpu_custom_call.1} parent=1 // pred_check_branch
      %76 = sbr.rel (0) target = $region33
    $region32: #{tpu_custom_call.1} parent=1 // pred_region
      %78 = dma.done [#allocation9], 128
    $region33: #{tpu_custom_call.1} parent=1 // pred_fallthru
      _
    %v79 = vld [vmem:[#allocation8] sm:$0xff]
    %v80 = vld [vmem:[#allocation2] sm:$0xff]
    %v81 = vld [vmem:[#allocation2 + $0x8] sm:$0xff]
    %v82 = vpack.c.bf16 %v81, %v80
    %v83 = vld [vmem:[#allocation5] sm:$0xf]
    %v84 = vld [vmem:[#allocation5 + $0x4] sm:$0xf]
    %v85 = vld [vmem:[#allocation5 + $0x8] sm:$0xf]
    %v86 = vld [vmem:[#allocation5 + $0xc] sm:$0xf]
    %v87 = vld [vmem:[#allocation5 + $0x10] sm:$0xf]
    %v88 = vld [vmem:[#allocation5 + $0x14] sm:$0xf]
    %v89 = vld [vmem:[#allocation5 + $0x18] sm:$0xf]
    %v90 = vld [vmem:[#allocation5 + $0x1c] sm:$0xf]
    %v91 = vld [vmem:[#allocation5 + $0x20] sm:$0xf]
    %v92 = vld [vmem:[#allocation5 + $0x24] sm:$0xf]
    %v93 = vld [vmem:[#allocation5 + $0x28] sm:$0xf]
    %v94 = vld [vmem:[#allocation5 + $0x2c] sm:$0xf]
    %v95 = vld [vmem:[#allocation5 + $0x30] sm:$0xf]
    %v96 = vld [vmem:[#allocation5 + $0x34] sm:$0xf]
    %v97 = vld [vmem:[#allocation5 + $0x38] sm:$0xf]
    %v98 = vld [vmem:[#allocation5 + $0x3c] sm:$0xf]
    %v99 = vperm.slane %v79, 0
    %v116 = vunpack.c.l.b16 %v83
    %v117 = vunpack.c.l.b16 %v84
    %v118 = vunpack.c.l.b16 %v85
    %v119 = vunpack.c.l.b16 %v86
    %v120 = vunpack.c.l.b16 %v87
    %v121 = vunpack.c.l.b16 %v88
    %v122 = vunpack.c.l.b16 %v89
    %v123 = vunpack.c.l.b16 %v90
    %v124 = vunpack.c.l.b16 %v91
    %v125 = vunpack.c.l.b16 %v92
    %v126 = vunpack.c.l.b16 %v93
    %v127 = vunpack.c.l.b16 %v94
    %v128 = vunpack.c.l.b16 %v95
    %v129 = vunpack.c.l.b16 %v96
    %v130 = vunpack.c.l.b16 %v97
    %v131 = vunpack.c.l.b16 %v98
    %v132 = vpack.c.b16 %v117, %v116
    %v133 = vpack.c.b16 %v119, %v118
    %v134 = vpack.c.b16 %v121, %v120
    %v135 = vpack.c.b16 %v123, %v122
    %v136 = vpack.c.b16 %v125, %v124
    %v137 = vpack.c.b16 %v127, %v126
    %v138 = vpack.c.b16 %v129, %v128
    %v139 = vpack.c.b16 %v131, %v130
    %148 = vmatpush.bf16.msra.mxu0 %v139
    %149 = vmatpush.bf16.msra.mxu0 %v138
    %150 = vmatpush.bf16.msra.mxu0 %v137
    %151 = vmatpush.bf16.msra.mxu0 %v136
    %152 = vmatpush.bf16.msra.mxu0 %v135
    %153 = vmatpush.bf16.msra.mxu0 %v134
    %154 = vmatpush.bf16.msra.mxu0 %v133
    %155 = vmatpush.bf16.msra.mxu0 %v132
    %156 = vmatmul.bf16.gmra.mxu0 %v82
    %v157 = vpop.f32.mrf.mxu0
    %v158 = vadd.f32 %v99, %v157
    %v159 = vpop.f32.mrf.mxu0
    %v160 = vadd.f32 %v99, %v159
    %161 = vdwg.mxu0
    %v162 = vmul.f32 %v158, 0.5
    %v163 = vmul.f32 %v160, 0.5
    %v164 = vmul.f32 %v158, 0.70710677
    %v165 = vmul.f32 %v160, 0.70710677
    %v166 = vmul.f32 %v164, %v164
    %v167 = vmin.f32 16.0, %v166
    %v168 = vmul.f32 %v167, 2.1237322e-06
    %v169 = vadd.f32 %v168, 0.00028619796
    %v170 = vmul.f32 %v167, %v169
    %v171 = vadd.f32 %v170, 0.0036580483
    %v172 = vmul.f32 %v167, %v171
    %v173 = vadd.f32 %v172, 0.05243302
    %v174 = vmul.f32 %v167, %v173
    %v175 = vadd.f32 %v174, 0.18741608
    %v176 = vmul.f32 %v167, %v175
    %v177 = vadd.f32 %v176, 1.1283791
    %v178 = vmul.f32 %v164, %v177
    %v179 = vmul.f32 %v167, 3.8918573e-05
    %v180 = vadd.f32 %v179, 0.001143296
    %v181 = vmul.f32 %v167, %v180
    %v182 = vadd.f32 %v181, 0.014752088
    %v183 = vmul.f32 %v167, %v182
    %v184 = vadd.f32 %v183, 0.112945676
    %v185 = vmul.f32 %v167, %v184
    %v186 = vadd.f32 %v185, 0.4994258
    %v187 = vmul.f32 %v167, %v186
    %v188 = vadd.f32 %v187, 1.0
    %v189 = vrcp.pop %v188
    %v190 = vmul.f32 %v188, %v189
    %v191 = vsub.f32 1.0, %v190
    %v192 = vmul.f32 %v189, %v191
    %v193 = vadd.f32 %v189, %v192
    %vm194 = vweird.f32 %v188
    %vm195 = vweird.f32 %v189
    %vm196 = vmor %vm194, %vm195
    %v197 = vsel %vm196, %v189, %v193
    %v198 = vand.u32 2147483647, %v188
    %vm199 = vcmp.eq.f32.partialorder %v198, 8.507059e+37
    %v200 = vand.u32 %v188, 2147483648
    %v201 = vor.u32 1.1754944e-38, %v200
    %v202 = vsel %vm199, %v201, %v197
    %v203 = vmul.f32 %v178, %v202
    %v204 = vmin.f32 %v203, 1.0
    %v205 = vmax.f32 %v204, -1.0
    %v206 = vmul.f32 %v165, %v165
    %v207 = vmin.f32 16.0, %v206
    %v208 = vmul.f32 %v207, 2.1237322e-06
    %v209 = vadd.f32 %v208, 0.00028619796
    %v210 = vmul.f32 %v207, %v209
    %v211 = vadd.f32 %v210, 0.0036580483
    %v212 = vmul.f32 %v207, %v211
    %v213 = vadd.f32 %v212, 0.05243302
    %v214 = vmul.f32 %v207, %v213
    %v215 = vadd.f32 %v214, 0.18741608
    %v216 = vmul.f32 %v207, %v215
    %v217 = vadd.f32 %v216, 1.1283791
    %v218 = vmul.f32 %v165, %v217
    %v219 = vmul.f32 %v207, 3.8918573e-05
    %v220 = vadd.f32 %v219, 0.001143296
    %v221 = vmul.f32 %v207, %v220
    %v222 = vadd.f32 %v221, 0.014752088
    %v223 = vmul.f32 %v207, %v222
    %v224 = vadd.f32 %v223, 0.112945676
    %v225 = vmul.f32 %v207, %v224
    %v226 = vadd.f32 %v225, 0.4994258
    %v227 = vmul.f32 %v207, %v226
    %v228 = vadd.f32 %v227, 1.0
    %v229 = vrcp.pop %v228
    %v230 = vmul.f32 %v228, %v229
    %v231 = vsub.f32 1.0, %v230
    %v232 = vmul.f32 %v229, %v231
    %v233 = vadd.f32 %v229, %v232
    %vm234 = vweird.f32 %v228
    %vm235 = vweird.f32 %v229
    %vm236 = vmor %vm234, %vm235
    %v237 = vsel %vm236, %v229, %v233
    %v238 = vand.u32 2147483647, %v228
    %vm239 = vcmp.eq.f32.partialorder %v238, 8.507059e+37
    %v240 = vand.u32 %v228, 2147483648
    %v241 = vor.u32 1.1754944e-38, %v240
    %v242 = vsel %vm239, %v241, %v237
    %v243 = vmul.f32 %v218, %v242
    %v244 = vmin.f32 %v243, 1.0
    %v245 = vmax.f32 %v244, -1.0
    %v246 = vadd.f32 %v205, 1.0
    %v247 = vadd.f32 %v245, 1.0
    %v248 = vmul.f32 %v162, %v246
    %v249 = vmul.f32 %v163, %v247
    %250 = vadd.xlane.f32.xlu0 %v248
    %v251 = vpop.xlane.xlu0 %250
    %252 = vadd.xlane.f32.xlu0 %v249
    %v253 = vpop.xlane.xlu0 %252
    %v254 = vmul.f32 %v248, %v248
    %v255 = vmul.f32 %v249, %v249
    %256 = vadd.xlane.f32.xlu0 %v254
    %v257 = vpop.xlane.xlu0 %256
    %258 = vadd.xlane.f32.xlu0 %v255
    %v259 = vpop.xlane.xlu0 %258
    %v260 = vmul.f32 %v251, 0.0078125
    %v261 = vmul.f32 %v253, 0.0078125
    %v262 = vmul.f32 %v257, 0.0078125
    %v263 = vmul.f32 %v259, 0.0078125
    %v264 = vmul.f32 %v260, %v260
    %v265 = vmul.f32 %v261, %v261
    %v266 = vsub.f32 %v262, %v264
    %v267 = vsub.f32 %v263, %v265
    %v268 = vadd.f32 %v266, 1e-05
    %v269 = vadd.f32 %v267, 1e-05
    %v270 = vrsqrt.pop %v268
    %v271 = vmul.f32 %v270, %v268
    %v272 = vmul.f32 %v271, %v270
    %v273 = vmul.f32 0.5, %v272
    %v274 = vsub.f32 1.5, %v273
    %v275 = vmul.f32 %v270, %v274
    %vm276 = vweird.f32 %v268
    %vm277 = vweird.f32 %v270
    %vm278 = vmor %vm276, %vm277
    %v279 = vsel %vm278, %v270, %v275
    %v280 = vrsqrt.pop %v269
    %v281 = vmul.f32 %v280, %v269
    %v282 = vmul.f32 %v281, %v280
    %v283 = vmul.f32 0.5, %v282
    %v284 = vsub.f32 1.5, %v283
    %v285 = vmul.f32 %v280, %v284
    %vm286 = vweird.f32 %v269
    %vm287 = vweird.f32 %v280
    %vm288 = vmor %vm286, %vm287
    %v289 = vsel %vm288, %v280, %v285
    %v290 = vsub.f32 %v248, %v260
    %v291 = vsub.f32 %v249, %v261
    %v292 = vmul.f32 %v290, %v279
    %v293 = vmul.f32 %v291, %v289
    %v294 = vperm.slane %v79, 1
    %v295 = vmul.f32 %v292, %v294
    %v296 = vmul.f32 %v293, %v294
    %v297 = vperm.slane %v79, 2
    %v298 = vadd.f32 %v295, %v297
    %v299 = vadd.f32 %v296, %v297
    %v300 = vpack.c.bf16 %v299, %v298
    %v301 = vld [vmem:[#allocation7] sm:$0xf]
    %v302 = vld [vmem:[#allocation7 + $0x4] sm:$0xf]
    %v303 = vld [vmem:[#allocation7 + $0x8] sm:$0xf]
    %v304 = vld [vmem:[#allocation7 + $0xc] sm:$0xf]
    %v305 = vld [vmem:[#allocation7 + $0x10] sm:$0xf]
    %v306 = vld [vmem:[#allocation7 + $0x14] sm:$0xf]
    %v307 = vld [vmem:[#allocation7 + $0x18] sm:$0xf]
    %v308 = vld [vmem:[#allocation7 + $0x1c] sm:$0xf]
    %v309 = vld [vmem:[#allocation7 + $0x20] sm:$0xf]
    %v310 = vld [vmem:[#allocation7 + $0x24] sm:$0xf]
    %v311 = vld [vmem:[#allocation7 + $0x28] sm:$0xf]
    %v312 = vld [vmem:[#allocation7 + $0x2c] sm:$0xf]
    %v313 = vld [vmem:[#allocation7 + $0x30] sm:$0xf]
    %v314 = vld [vmem:[#allocation7 + $0x34] sm:$0xf]
    %v315 = vld [vmem:[#allocation7 + $0x38] sm:$0xf]
    %v316 = vld [vmem:[#allocation7 + $0x3c] sm:$0xf]
    %v317 = vperm.slane %v79, 3
    %v334 = vunpack.c.l.b16 %v301
    %v335 = vunpack.c.l.b16 %v302
    %v336 = vunpack.c.l.b16 %v303
    %v337 = vunpack.c.l.b16 %v304
    %v338 = vunpack.c.l.b16 %v305
    %v339 = vunpack.c.l.b16 %v306
    %v340 = vunpack.c.l.b16 %v307
    %v341 = vunpack.c.l.b16 %v308
    %v342 = vunpack.c.l.b16 %v309
    %v343 = vunpack.c.l.b16 %v310
    %v344 = vunpack.c.l.b16 %v311
    %v345 = vunpack.c.l.b16 %v312
    %v346 = vunpack.c.l.b16 %v313
    %v347 = vunpack.c.l.b16 %v314
    %v348 = vunpack.c.l.b16 %v315
    %v349 = vunpack.c.l.b16 %v316
    %v350 = vpack.c.b16 %v335, %v334
    %v351 = vpack.c.b16 %v337, %v336
    %v352 = vpack.c.b16 %v339, %v338
    %v353 = vpack.c.b16 %v341, %v340
    %v354 = vpack.c.b16 %v343, %v342
    %v355 = vpack.c.b16 %v345, %v344
    %v356 = vpack.c.b16 %v347, %v346
    %v357 = vpack.c.b16 %v349, %v348
    %366 = vmatpush.bf16.msra.mxu0 %v357
    %367 = vmatpush.bf16.msra.mxu0 %v356
    %368 = vmatpush.bf16.msra.mxu0 %v355
    %369 = vmatpush.bf16.msra.mxu0 %v354
    %370 = vmatpush.bf16.msra.mxu0 %v353
    %371 = vmatpush.bf16.msra.mxu0 %v352
    %372 = vmatpush.bf16.msra.mxu0 %v351
    %373 = vmatpush.bf16.msra.mxu0 %v350
    %374 = vmatmul.bf16.gmra.mxu0 %v300
    %v375 = vpop.f32.mrf.mxu0
    %v376 = vadd.f32 %v317, %v375
    %v377 = vpop.f32.mrf.mxu0
    %v378 = vadd.f32 %v317, %v377
    %379 = vdwg.mxu0
    %v380 = vmul.f32 %v376, 0.5
    %v381 = vmul.f32 %v378, 0.5
    %v382 = vmul.f32 %v376, 0.70710677
    %v383 = vmul.f32 %v378, 0.70710677
    %v384 = vmul.f32 %v382, %v382
    %v385 = vmin.f32 16.0, %v384
    %v386 = vmul.f32 %v385, 2.1237322e-06
    %v387 = vadd.f32 %v386, 0.00028619796
    %v388 = vmul.f32 %v385, %v387
    %v389 = vadd.f32 %v388, 0.0036580483
    %v390 = vmul.f32 %v385, %v389
    %v391 = vadd.f32 %v390, 0.05243302
    %v392 = vmul.f32 %v385, %v391
    %v393 = vadd.f32 %v392, 0.18741608
    %v394 = vmul.f32 %v385, %v393
    %v395 = vadd.f32 %v394, 1.1283791
    %v396 = vmul.f32 %v382, %v395
    %v397 = vmul.f32 %v385, 3.8918573e-05
    %v398 = vadd.f32 %v397, 0.001143296
    %v399 = vmul.f32 %v385, %v398
    %v400 = vadd.f32 %v399, 0.014752088
    %v401 = vmul.f32 %v385, %v400
    %v402 = vadd.f32 %v401, 0.112945676
    %v403 = vmul.f32 %v385, %v402
    %v404 = vadd.f32 %v403, 0.4994258
    %v405 = vmul.f32 %v385, %v404
    %v406 = vadd.f32 %v405, 1.0
    %v407 = vrcp.pop %v406
    %v408 = vmul.f32 %v406, %v407
    %v409 = vsub.f32 1.0, %v408
    %v410 = vmul.f32 %v407, %v409
    %v411 = vadd.f32 %v407, %v410
    %vm412 = vweird.f32 %v406
    %vm413 = vweird.f32 %v407
    %vm414 = vmor %vm412, %vm413
    %v415 = vsel %vm414, %v407, %v411
    %v416 = vand.u32 2147483647, %v406
    %vm417 = vcmp.eq.f32.partialorder %v416, 8.507059e+37
    %v418 = vand.u32 %v406, 2147483648
    %v419 = vor.u32 1.1754944e-38, %v418
    %v420 = vsel %vm417, %v419, %v415
    %v421 = vmul.f32 %v396, %v420
    %v422 = vmin.f32 %v421, 1.0
    %v423 = vmax.f32 %v422, -1.0
    %v424 = vmul.f32 %v383, %v383
    %v425 = vmin.f32 16.0, %v424
    %v426 = vmul.f32 %v425, 2.1237322e-06
    %v427 = vadd.f32 %v426, 0.00028619796
    %v428 = vmul.f32 %v425, %v427
    %v429 = vadd.f32 %v428, 0.0036580483
    %v430 = vmul.f32 %v425, %v429
    %v431 = vadd.f32 %v430, 0.05243302
    %v432 = vmul.f32 %v425, %v431
    %v433 = vadd.f32 %v432, 0.18741608
    %v434 = vmul.f32 %v425, %v433
    %v435 = vadd.f32 %v434, 1.1283791
    %v436 = vmul.f32 %v383, %v435
    %v437 = vmul.f32 %v425, 3.8918573e-05
    %v438 = vadd.f32 %v437, 0.001143296
    %v439 = vmul.f32 %v425, %v438
    %v440 = vadd.f32 %v439, 0.014752088
    %v441 = vmul.f32 %v425, %v440
    %v442 = vadd.f32 %v441, 0.112945676
    %v443 = vmul.f32 %v425, %v442
    %v444 = vadd.f32 %v443, 0.4994258
    %v445 = vmul.f32 %v425, %v444
    %v446 = vadd.f32 %v445, 1.0
    %v447 = vrcp.pop %v446
    %v448 = vmul.f32 %v446, %v447
    %v449 = vsub.f32 1.0, %v448
    %v450 = vmul.f32 %v447, %v449
    %v451 = vadd.f32 %v447, %v450
    %vm452 = vweird.f32 %v446
    %vm453 = vweird.f32 %v447
    %vm454 = vmor %vm452, %vm453
    %v455 = vsel %vm454, %v447, %v451
    %v456 = vand.u32 2147483647, %v446
    %vm457 = vcmp.eq.f32.partialorder %v456, 8.507059e+37
    %v458 = vand.u32 %v446, 2147483648
    %v459 = vor.u32 1.1754944e-38, %v458
    %v460 = vsel %vm457, %v459, %v455
    %v461 = vmul.f32 %v436, %v460
    %v462 = vmin.f32 %v461, 1.0
    %v463 = vmax.f32 %v462, -1.0
    %v464 = vadd.f32 %v423, 1.0
    %v465 = vadd.f32 %v463, 1.0
    %v466 = vmul.f32 %v380, %v464
    %v467 = vmul.f32 %v381, %v465
    %468 = vadd.xlane.f32.xlu0 %v466
    %v469 = vpop.xlane.xlu0 %468
    %470 = vadd.xlane.f32.xlu0 %v467
    %v471 = vpop.xlane.xlu0 %470
    %v472 = vmul.f32 %v466, %v466
    %v473 = vmul.f32 %v467, %v467
    %474 = vadd.xlane.f32.xlu0 %v472
    %v475 = vpop.xlane.xlu0 %474
    %476 = vadd.xlane.f32.xlu0 %v473
    %v477 = vpop.xlane.xlu0 %476
    %v478 = vmul.f32 %v469, 0.0078125
    %v479 = vmul.f32 %v471, 0.0078125
    %v480 = vmul.f32 %v475, 0.0078125
    %v481 = vmul.f32 %v477, 0.0078125
    %v482 = vmul.f32 %v478, %v478
    %v483 = vmul.f32 %v479, %v479
    %v484 = vsub.f32 %v480, %v482
    %v485 = vsub.f32 %v481, %v483
    %v486 = vadd.f32 %v484, 1e-05
    %v487 = vadd.f32 %v485, 1e-05
    %v488 = vrsqrt.pop %v486
    %v489 = vmul.f32 %v488, %v486
    %v490 = vmul.f32 %v489, %v488
    %v491 = vmul.f32 0.5, %v490
    %v492 = vsub.f32 1.5, %v491
    %v493 = vmul.f32 %v488, %v492
    %vm494 = vweird.f32 %v486
    %vm495 = vweird.f32 %v488
    %vm496 = vmor %vm494, %vm495
    %v497 = vsel %vm496, %v488, %v493
    %v498 = vrsqrt.pop %v487
    %v499 = vmul.f32 %v498, %v487
    %v500 = vmul.f32 %v499, %v498
    %v501 = vmul.f32 0.5, %v500
    %v502 = vsub.f32 1.5, %v501
    %v503 = vmul.f32 %v498, %v502
    %vm504 = vweird.f32 %v487
    %vm505 = vweird.f32 %v498
    %vm506 = vmor %vm504, %vm505
    %v507 = vsel %vm506, %v498, %v503
    %v508 = vsub.f32 %v466, %v478
    %v509 = vsub.f32 %v467, %v479
    %v510 = vmul.f32 %v508, %v497
    %v511 = vmul.f32 %v509, %v507
    %v512 = vperm.slane %v79, 4
    %v513 = vmul.f32 %v510, %v512
    %v514 = vmul.f32 %v511, %v512
    %v515 = vperm.slane %v79, 5
    %v516 = vadd.f32 %v513, %v515
    %v517 = vadd.f32 %v514, %v515
    %v518 = vadd.f32 %v80, %v516
    %v519 = vadd.f32 %v81, %v517
    %520 = vst [vmem:[#allocation10] sm:$0xff] %v518
    %521 = vst [vmem:[#allocation10 + $0x8] sm:$0xff] %v519
    // Predicated region
    $region34: #{tpu_custom_call.1} parent=1 // pred_check
      _
    $region35: #{tpu_custom_call.1} parent=1 // pred_check_branch
      %523 = sbr.rel (0) target = $region37
    $region36: #{tpu_custom_call.1} parent=1 // pred_region
      %525 = vsyncadd [#allocation4], 0
      %s526 = sshll.u32 [#allocation10], 4
      %s527 = int_to_ptr.vmem [resolvable:$true] %s526
      %s528 = sshll.u32 %s4, 4
      %s529 = int_to_ptr.hbm [resolvable:$true] %s528
      %534 = dma.vmem_to_hbm [thread:$0]  %s527, 256, %s529, [#allocation4], 128, 128, 8
    $region37: #{tpu_custom_call.1} parent=1 // pred_fallthru
      _
    // Predicated region
    $region38: #{tpu_custom_call.1} parent=1 // pred_check
      _
    $region39: #{tpu_custom_call.1} parent=1 // pred_check_branch
      %536 = sbr.rel (0) target = $region41
    $region40: #{tpu_custom_call.1} parent=1 // pred_region
      %538 = dma.done [#allocation4], 256
    $region41: #{tpu_custom_call.1} parent=1 // pred_fallthru
      _
    %539 = vsyncpa [#allocation3], 1
    %540 = vsyncpa [#allocation6], 1
    %541 = vsyncpa [#allocation9], 1
    %542 = vsyncpa [#allocation4], 1

</llo_original>
